<compile_context>
chip_gen: v5e
topology: v5e:2x2
jax: 0.10.0
libtpu: 0.0.40
codegen_flags: <defaults>
</compile_context>

<pallas_src>
import functools

import jax
import jax.numpy as jnp
from jax import lax
from jax.experimental import pallas as pl
from jax.experimental.pallas import tpu as pltpu

EPS = 1e-5


# --------------------------------------------------------------------------
# in-kernel helpers
# --------------------------------------------------------------------------
def _write_partial_stats(st_ref, y_f32):
    """Per-tile partial BN stats: row 0 = sum, row 1 = sum of squares."""
    c = y_f32.shape[-1]
    s = jnp.sum(y_f32, axis=0, keepdims=True)
    ss = jnp.sum(y_f32 * y_f32, axis=0, keepdims=True)
    st_ref[...] = jnp.concatenate([s, ss, jnp.zeros((6, c), jnp.float32)], axis=0)


# --------------------------------------------------------------------------
# stage A: conv1 (1x1) + partial BN1 stats        grid over M row-tiles
# --------------------------------------------------------------------------
def conv1_kernel(x_ref, w_ref, y_ref, st_ref):
    y = jnp.dot(x_ref[...].astype(jnp.bfloat16), w_ref[...],
                preferred_element_type=jnp.float32)
    yq = y.astype(jnp.bfloat16)                 # bf16 staging of the intermediate
    y_ref[...] = yq
    _write_partial_stats(st_ref, yq.astype(jnp.float32))


# --------------------------------------------------------------------------
# stage B: BN1+ReLU -> 3x3 conv (single im2col matmul) + partial BN2 stats
#          grid over batch images (halo padding stays inside the block)
# TODO(synk): for large feature maps, tile H as well and recompute conv1 on
#             H_tile+2 rows inside the tile instead of halo-DMA of y1.
# --------------------------------------------------------------------------
def conv2_kernel(y1_ref, sc_ref, sh_ref, w2_ref, y2_ref, st_ref, *, H, W):
    P = y1_ref.shape[-1]
    HW = H * W
    a = y1_ref[0].astype(jnp.float32)
    a = jnp.maximum(a * sc_ref[...] + sh_ref[...], 0.0)      # folded BN1 + ReLU (f32)
    a = a.astype(jnp.bfloat16).reshape(H, W, P)               # bf16 BEFORE im2col
    zh = jnp.zeros((1, W, P), jnp.bfloat16)
    zw = jnp.zeros((H + 2, 1, P), jnp.bfloat16)
    ap = jnp.concatenate([zh, a, zh], axis=0)                 # halo rows only
    ap = jnp.concatenate([zw, ap, zw], axis=1)                # halo cols only
    # TODO(synk): at planes >= 128 the nine slices are 128-lane aligned; for
    # planes < 128 a pltpu.roll-based shift + halo mask would avoid the
    # lane-misaligned concat relayout.  On v7x, re-benchmark 9 accumulating
    # dots (MRB in-place accumulate) against this im2col matmul.
    cols = [ap[dy:dy + H, dx:dx + W, :].reshape(HW, P)
            for dy in range(3) for dx in range(3)]
    patches = jnp.concatenate(cols, axis=-1)                  # (HW, 9P) bf16
    y2 = jnp.dot(patches, w2_ref[...], preferred_element_type=jnp.float32)
    yq = y2.astype(jnp.bfloat16)
    y2_ref[0] = yq
    _write_partial_stats(st_ref, yq.astype(jnp.float32))


# --------------------------------------------------------------------------
# stage C: BN2+ReLU -> conv3 (1x1) + partial BN3 stats     grid over M row-tiles
# --------------------------------------------------------------------------
def conv3_kernel(y2_ref, sc_ref, sh_ref, w3_ref, y3_ref, st_ref):
    a = y2_ref[...].astype(jnp.float32)
    a = jnp.maximum(a * sc_ref[...] + sh_ref[...], 0.0).astype(jnp.bfloat16)
    y3 = jnp.dot(a, w3_ref[...], preferred_element_type=jnp.float32)
    yq = y3.astype(jnp.bfloat16)
    y3_ref[...] = yq
    _write_partial_stats(st_ref, yq.astype(jnp.float32))


# --------------------------------------------------------------------------
# stage D: BN3 + residual add + ReLU                       grid over M row-tiles
# --------------------------------------------------------------------------
def bn_add_relu_kernel(y3_ref, x_ref, sc_ref, sh_ref, out_ref):
    y3 = y3_ref[...].astype(jnp.float32)
    out_ref[...] = jnp.maximum(y3 * sc_ref[...] + sh_ref[...] + x_ref[...], 0.0)


# --------------------------------------------------------------------------
# wrapper
# --------------------------------------------------------------------------
def _full_spec(shape):
    n = len(shape)
    return pl.BlockSpec(shape, lambda i: (0,) * n)


def _row_spec(shape):
    n = len(shape)
    return pl.BlockSpec(shape, lambda i: (i,) + (0,) * (n - 1))


def _pick_block_m(M, target):
    """Largest multiple of 8 that divides M and is <= target."""
    assert M % 8 == 0, "N*H*W must be a multiple of 8"
    bm = min(target, M)
    bm -= bm % 8
    while M % bm:
        bm -= 8
    return bm


def _fold_bn(stats, count, gamma, beta):
    """Fold per-tile (sum, sumsq) partials into per-channel scale/shift."""
    c = stats.shape[-1]
    st = stats.reshape(-1, 8, c)[:, :2, :].sum(axis=0)        # (2, C) global sums
    mean = st[0] / count
    # TODO(synk): E[y^2]-mean^2 can cancel for high-mean activations; switch to
    # a Welford/Chan pairwise combine of per-tile (mean, M2) if that bites.
    var = st[1] / count - mean * mean                         # biased (training) var
    scale = gamma.reshape(-1) * lax.rsqrt(var + EPS)
    shift = beta.reshape(-1) - mean * scale
    return scale.reshape(1, c), shift.reshape(1, c)


def bottleneck_pallas(x_nhwc, params, *, block_m=512):
    (w1, g1, b1, w2, g2, b2, w3, g3, b3) = params
    N, H, W, Cin = x_nhwc.shape
    P = w1.shape[1]
    Cout = w3.shape[-1]
    assert Cout == Cin, "residual add requires planes*4 == in_planes"
    M, HW = N * H * W, H * W
    bm = _pick_block_m(M, block_m)     # 512-2048 on v6e, smaller on v7x (64 MiB VMEM)
    nt = M // bm

    x2d = x_nhwc.reshape(M, Cin)
    w1b = w1.astype(jnp.bfloat16)
    w2b = w2.reshape(9 * P, P).astype(jnp.bfloat16)           # im2col-packed weights
    w3b = w3.astype(jnp.bfloat16)

    parallel = pltpu.CompilerParams(dimension_semantics=("parallel",))
    # TODO(synk): for production tiles raise vmem_limit_bytes per generation
    # (toward ~100 MiB on v5e/v6e, <=~56 MiB on v7x) and retune block_m.

    def stats_shape(n):
        return jax.ShapeDtypeStruct((n * 8, P), jnp.float32)

    # ---- stage A: conv1 + partial stats -------------------------------------
    y1, st1 = pl.pallas_call(
        conv1_kernel,
        grid=(nt,),
        in_specs=[_row_spec((bm, Cin)), _full_spec((Cin, P))],
        out_specs=(_row_spec((bm, P)), _row_spec((8, P))),
        out_shape=(jax.ShapeDtypeStruct((M, P), jnp.bfloat16), stats_shape(nt)),
        compiler_params=parallel,
        cost_estimate=pl.CostEstimate(flops=2 * M * Cin * P, transcendentals=0,
                                      bytes_accessed=4 * M * Cin + 2 * M * P),
    )(x2d, w1b)
    sc1, sh1 = _fold_bn(st1, M, g1, b1)

    # ---- stage B: BN1+ReLU -> 3x3 conv + partial stats ----------------------
    y2, st2 = pl.pallas_call(
        functools.partial(conv2_kernel, H=H, W=W),
        grid=(N,),
        in_specs=[_row_spec((1, HW, P)), _full_spec((1, P)), _full_spec((1, P)),
                  _full_spec((9 * P, P))],
        out_specs=(_row_spec((1, HW, P)), _row_spec((8, P))),
        out_shape=(jax.ShapeDtypeStruct((N, HW, P), jnp.bfloat16), stats_shape(N)),
        compiler_params=parallel,
        cost_estimate=pl.CostEstimate(flops=2 * M * 9 * P * P, transcendentals=0,
                                      bytes_accessed=4 * M * P + 18 * P * P * 2),
    )(y1.reshape(N, HW, P), sc1, sh1, w2b)
    sc2, sh2 = _fold_bn(st2, M, g2, b2)

    # ---- stage C: BN2+ReLU -> conv3 + partial stats -------------------------
    y3, st3 = pl.pallas_call(
        conv3_kernel,
        grid=(nt,),
        in_specs=[_row_spec((bm, P)), _full_spec((1, P)), _full_spec((1, P)),
                  _full_spec((P, Cout))],
        out_specs=(_row_spec((bm, Cout)),
                   pl.BlockSpec((8, Cout), lambda i: (i, 0))),
        out_shape=(jax.ShapeDtypeStruct((M, Cout), jnp.bfloat16),
                   jax.ShapeDtypeStruct((nt * 8, Cout), jnp.float32)),
        compiler_params=parallel,
        cost_estimate=pl.CostEstimate(flops=2 * M * P * Cout, transcendentals=0,
                                      bytes_accessed=2 * M * P + 2 * M * Cout),
    )(y2.reshape(M, P), sc2, sh2, w3b)
    sc3, sh3 = _fold_bn(st3, M, g3, b3)

    # ---- stage D: BN3 + residual + ReLU -------------------------------------
    out2d = pl.pallas_call(
        bn_add_relu_kernel,
        grid=(nt,),
        in_specs=[_row_spec((bm, Cout)), _row_spec((bm, Cin)),
                  _full_spec((1, Cout)), _full_spec((1, Cout))],
        out_specs=pl.BlockSpec((bm, Cout), lambda i: (i, 0)),
        out_shape=jax.ShapeDtypeStruct((M, Cout), jnp.float32),
        compiler_params=parallel,
        cost_estimate=pl.CostEstimate(flops=3 * M * Cout, transcendentals=0,
                                      bytes_accessed=2 * M * Cout + 8 * M * Cout),
    )(y3, x2d, sc3, sh3)

    return out2d.reshape(N, H, W, Cout)


# --------------------------------------------------------------------------
# pure-JAX reference (PyTorch training-mode BN semantics, mirroring the
# kernel's mixed-precision policy: bf16 MXU operands + bf16 staging of the
# inter-stage activations, f32 accumulation / BN math)
# --------------------------------------------------------------------------
def bottleneck_ref(x, params):
    (w1, g1, b1, w2, g2, b2, w3, g3, b3) = params
    N, H, W, _ = x.shape
    P = w1.shape[1]

    def bn(y, g, b):
        m = y.mean(axis=(0, 1, 2), keepdims=True)
        v = (y * y).mean(axis=(0, 1, 2), keepdims=True) - m * m
        scale = g.reshape(1, 1, 1, -1) * lax.rsqrt(v + EPS)
        shift = b.reshape(1, 1, 1, -1) - m * scale
        return y * scale + shift

    def mm(a, w):
        return jnp.einsum("nhwc,cd->nhwd", a.astype(jnp.bfloat16),
                          w.astype(jnp.bfloat16),
                          preferred_element_type=jnp.float32)

    q = lambda t: t.astype(jnp.bfloat16).astype(jnp.float32)   # bf16 staging

    y1 = q(mm(x, w1))
    a1 = jax.nn.relu(bn(y1, g1, b1)).astype(jnp.bfloat16)
    ap = jnp.pad(a1, ((0, 0), (1, 1), (1, 1), (0, 0)))
    y2 = jnp.zeros((N, H, W, P), jnp.float32)
    for t in range(9):
        dy, dx = t // 3, t % 3
        y2 = y2 + jnp.einsum("nhwc,cd->nhwd", ap[:, dy:dy + H, dx:dx + W, :],
                             w2[t].astype(jnp.bfloat16),
                             preferred_element_type=jnp.float32)
    y2 = q(y2)
    a2 = jax.nn.relu(bn(y2, g2, b2))
    y3 = bn(q(mm(a2, w3)), g3, b3)
    return jax.nn.relu(y3 + x)


# --------------------------------------------------------------------------
# parameter setup
# --------------------------------------------------------------------------
def init_params(key, in_planes, planes):
    expansion = 4
    k1, k2, k3 = jax.random.split(key, 3)
    # conv weights stored transposed for matmul: (Cin, Cout); 3x3 as (9, Cin, Cout)
    w1 = jax.random.normal(k1, (in_planes, planes), jnp.float32) * (2.0 / in_planes) ** 0.5
    w2 = jax.random.normal(k2, (9, planes, planes), jnp.float32) * (2.0 / (9 * planes)) ** 0.5
    w3 = jax.random.normal(k3, (planes, planes * expansion), jnp.float32) * (2.0 / planes) ** 0.5
    # BatchNorm affine params (PyTorch default init: weight=1, bias=0)
    g1 = jnp.ones((1, planes), jnp.float32)
    b1 = jnp.zeros((1, planes), jnp.float32)
    g2 = jnp.ones((1, planes), jnp.float32)
    b2 = jnp.zeros((1, planes), jnp.float32)
    g3 = jnp.ones((1, planes * expansion), jnp.float32)
    b3 = jnp.zeros((1, planes * expansion), jnp.float32)
    return (w1, g1, b1, w2, g2, b2, w3, g3, b3)


if __name__ == "__main__":
    # Small but lane-dense demo: in_planes = planes*4 = 128 so the residual add
    # is valid (stride=1, downsample=None) and channels fill the 128 lanes.
    N, H, W = 2, 16, 16
    planes = 32
    in_planes = planes * 4  # 128

    key = jax.random.PRNGKey(0)
    kx, kp = jax.random.split(key)
    x = jax.random.normal(kx, (N, H, W, in_planes), jnp.float32)  # NHWC
    params = init_params(kp, in_planes, planes)

    # block_m=128 -> 4 grid steps over M=512 rows (exercise the tiled pipeline).
    out = jax.block_until_ready(bottleneck_pallas(x, params, block_m=128))
    ref = bottleneck_ref(x, params)

    assert out.shape == (N, H, W, in_planes)
    err = float(jnp.max(jnp.abs(out - ref)))
    # bf16 MXU operands + bf16 activation staging on both sides; tolerance sized
    # for bf16 ulp divergence accumulated across three matmul+BN stages.
    assert jnp.allclose(out, ref, atol=1e-2, rtol=1e-2), err

    print("KERNEL_OK")
</pallas_src>

<mosaic_0001>
module attributes {stable_mosaic.version = 11 : i64} {
  func.func @conv1_kernel(%arg0: i32, %arg1: memref<128x128xf32, #tpu.memory_space<vmem>>, %arg2: memref<128x32xbf16, #tpu.memory_space<vmem>>, %arg3: memref<128x32xbf16, #tpu.memory_space<vmem>>, %arg4: memref<8x32xf32, #tpu.memory_space<vmem>>) attributes {dimension_semantics = [#tpu.dimension_semantics<parallel>], iteration_bounds = array<i64: 4>, scalar_prefetch = 0 : i64, scratch_operands = 0 : i64, tpu.core_type = #tpu.core_type<tc>, window_params = [{transform_indices = @transform_0, window_bounds = array<i64: 128, 128>}, {pipeline_mode = #tpu.pipeline_mode<synchronous>, transform_indices = @transform_1, window_bounds = array<i64: 128, 32>}, {transform_indices = @transform_2, window_bounds = array<i64: 128, 32>}, {transform_indices = @transform_3, window_bounds = array<i64: 8, 32>}]} {
    %c0 = arith.constant 0 : index
    %c0_0 = arith.constant 0 : index
    %0 = vector.load %arg1[%c0, %c0_0] : memref<128x128xf32, #tpu.memory_space<vmem>>, vector<128x128xf32>
    %1 = arith.truncf %0 : vector<128x128xf32> to vector<128x128xbf16>
    %c0_1 = arith.constant 0 : index
    %c0_2 = arith.constant 0 : index
    %2 = vector.load %arg2[%c0_1, %c0_2] : memref<128x32xbf16, #tpu.memory_space<vmem>>, vector<128x32xbf16>
    %cst = arith.constant dense<0.000000e+00> : vector<128x32xf32>
    %3 = tpu.matmul %1, %2, %cst {dimension_numbers = #tpu.dot_dimension_numbers<[1], [0], [0], [1], [0, 0, 1, 1], [], []>} : vector<128x128xbf16>, vector<128x32xbf16>, vector<128x32xf32> -> vector<128x32xf32>
    %4 = arith.truncf %3 : vector<128x32xf32> to vector<128x32xbf16>
    %c0_3 = arith.constant 0 : index
    %c0_4 = arith.constant 0 : index
    %5 = vector.load %arg3[%c0_3, %c0_4] : memref<128x32xbf16, #tpu.memory_space<vmem>>, vector<128x32xbf16>
    tpu.vector_store %arg3[%c0_3, %c0_4], %4 {strides = array<i32>} : memref<128x32xbf16, #tpu.memory_space<vmem>>, vector<128x32xbf16>,
    %6 = arith.extf %4 : vector<128x32xbf16> to vector<128x32xf32>
    %cst_5 = arith.constant dense<0.000000e+00> : vector<32xf32>
    %7 = vector.multi_reduction <add>, %6, %cst_5 [0] : vector<128x32xf32> to vector<32xf32>
    %8 = vector.shape_cast %7 : vector<32xf32> to vector<1x32xf32>
    %9 = arith.mulf %6, %6 : vector<128x32xf32>
    %cst_6 = arith.constant dense<0.000000e+00> : vector<32xf32>
    %10 = vector.multi_reduction <add>, %9, %cst_6 [0] : vector<128x32xf32> to vector<32xf32>
    %11 = vector.shape_cast %10 : vector<32xf32> to vector<1x32xf32>
    %cst_7 = arith.constant 0.000000e+00 : f32
    %12 = vector.broadcast %cst_7 : f32 to vector<6x32xf32>
    %13 = tpu.concatenate %8, %11, %12 in 0 : vector<1x32xf32>, vector<1x32xf32>, vector<6x32xf32> -> vector<8x32xf32>
    %c0_8 = arith.constant 0 : index
    %c0_9 = arith.constant 0 : index
    %14 = vector.load %arg4[%c0_8, %c0_9] : memref<8x32xf32, #tpu.memory_space<vmem>>, vector<8x32xf32>
    tpu.vector_store %arg4[%c0_8, %c0_9], %13 {strides = array<i32>} : memref<8x32xf32, #tpu.memory_space<vmem>>, vector<8x32xf32>,
    return
  }
  func.func @transform_0(%arg0: i32) -> (i32, i32) {
    %c0_i32 = arith.constant 0 : i32
    %c0_i32_0 = arith.constant 0 : i32
    return %arg0, %c0_i32 : i32, i32
  }
  func.func @transform_1(%arg0: i32) -> (i32, i32) {
    %c0_i32 = arith.constant 0 : i32
    %c0_i32_0 = arith.constant 0 : i32
    %c0_i32_1 = arith.constant 0 : i32
    return %c0_i32, %c0_i32_0 : i32, i32
  }
  func.func @transform_2(%arg0: i32) -> (i32, i32) {
    %c0_i32 = arith.constant 0 : i32
    %c0_i32_0 = arith.constant 0 : i32
    return %arg0, %c0_i32 : i32, i32
  }
  func.func @transform_3(%arg0: i32) -> (i32, i32) {
    %c0_i32 = arith.constant 0 : i32
    %c0_i32_0 = arith.constant 0 : i32
    return %arg0, %c0_i32 : i32, i32
  }
}

</mosaic_0001>

<llo_original>
// kernel: tpu_custom_call.1
$region0: #{tpu_custom_call.1}
  #allocation0 [shape = 'u32[]', space=smem, size = 0x4, offset = 0x4, fixed_abs, tag = 'smem constant byte address 0x4 - core index']
  #allocation1 [shape = 'u32[72,128]{1,0:T(1,128)}', space=vmem, size = 0x9000, scoped, tag = 'internal scratch']
  %s0 = inlined_call_operand.hbm [shape: f32[512,128], index: 0, kind: input, shape index: {}]
  %s1 = inlined_call_operand.vmem [shape: bf16[128,32], index: 1, kind: input, shape index: {}]
  %s2 = inlined_call_operand.vmem [shape: bf16[512,32], index: 2, kind: output, shape index: {0}]
  %s3 = inlined_call_operand.hbm [shape: f32[32,32], index: 3, kind: output, shape index: {1}]
  %4 = xla_tuple %s2, %s3
  %s5 = sld [smem:[#allocation0]]
  $region53: #{tpu_custom_call.1} parent=0
    _
  %s7 = ssub.s32 1, %s5
  %s8 = scalar_select 0, %s7, %s5
  $region1: #{tpu_custom_call.1} parent=0
    #allocation2 [shape = 'u8[131072]{0}', space=vmem, size = 0x20000, scoped, tag = 'input window, operand 0']
    #allocation3 [shape = 's32[2]{0}', space=sflag, size = 0x8, scoped, tag = 'scoped memory for tpu_custom_call.1']
    #allocation4 [shape = 's32[2]{0}', space=sflag, size = 0x8, scoped, tag = 'scoped memory for tpu_custom_call.1']
    #allocation5 [shape = 'u8[8192]{0}', space=vmem, size = 0x2000, scoped, tag = 'output window, operand 1']
    %9 = vsyncpa [#allocation3], 0
    %s10 = scalar_lea.sflag [#allocation3], 1
    %11 = vsyncpa %s10, 0
    %12 = vsyncpa [#allocation4], 0
    %s13 = scalar_lea.sflag [#allocation4], 1
    %14 = vsyncpa %s13, 0
    loop: start=0, step=1, limit=6
    $region2: #{tpu_custom_call.1} parent=1 // loop_pre_header
      _
    $region3: #{tpu_custom_call.1} parent=1 // loop_header
      %s16 = sphi 0, %s20
      %p17 = scmp.ge.s32.totalorder %s16, 6
      %s26 = sphi 0, %s28
      %s29 = sphi 0, %s26
      %s30 = sphi 0, %s29
      %s46 = sphi 0, %s30
      %s50 = sphi 0, %s50
      %s52 = sphi 0, %s50
      %s53 = sphi 0, %s52
      %s67 = sphi 0, %s53
      %s73 = sphi 0, %s75
      %s76 = sphi 0, %s73
      %s77 = sphi 0, %s76
      %s93 = sphi 0, %s77
      %s99 = sphi 0, %s101
      %s102 = sphi 0, %s99
      %s103 = sphi 0, %s102
      %s119 = sphi 0, %s103
    $region4: #{tpu_custom_call.1} parent=1 // loop_header_branch
      %19 = sbr.rel (%p17) target = $region8
    $region5: #{tpu_custom_call.1} parent=1 // loop_body
      %s21 = ssub.s32 %s16, 1
      %s22 = ssub.s32 %s16, 2
      %s23 = sadd.s32 %s16, 1
      %s24 = ssub.s32 %s16, %s23
      %p25 = scmp.eq.s32.totalorder %s24, 0
      %s27 = sadd.s32 %s26, 1
      %s28 = scalar_select %p25, %s26, %s27
      %p31 = pneg %p25
      %p32 = scmp.eq.s32.totalorder %s16, 3
      %p33 = por %p31, %p32
      %p34 = scmp.ne.s32.totalorder %s26, %s29
      %p35 = scmp.eq.s32.totalorder %s16, 0
      %p36 = por %p34, %p35
      %p37 = scmp.ne.s32.totalorder %s26, %s29
      %p38 = scmp.eq.s32.totalorder %s21, 3
      %p39 = por %p37, %p38
      %p40 = scmp.ne.s32.totalorder %s29, %s30
      %p41 = scmp.eq.s32.totalorder %s21, 0
      %p42 = por %p40, %p41
      %p43 = scmp.ne.s32.totalorder %s29, %s30
      %p44 = scmp.eq.s32.totalorder %s22, 3
      %p45 = por %p43, %p44
      %p47 = scmp.ne.s32.totalorder %s30, %s46
      %p48 = scmp.eq.s32.totalorder %s22, 0
      %p49 = por %p47, %p48
      %s51 = sadd.s32 %s50, 1
      %p54 = scmp.eq.s32.totalorder %s16, 3
      %p55 = scmp.ne.s32.totalorder %s50, %s52
      %p56 = scmp.eq.s32.totalorder %s16, 0
      %p57 = por %p55, %p56
      %p58 = scmp.ne.s32.totalorder %s50, %s52
      %p59 = scmp.eq.s32.totalorder %s21, 3
      %p60 = por %p58, %p59
      %p61 = scmp.ne.s32.totalorder %s52, %s53
      %p62 = scmp.eq.s32.totalorder %s21, 0
      %p63 = por %p61, %p62
      %p64 = scmp.ne.s32.totalorder %s52, %s53
      %p65 = scmp.eq.s32.totalorder %s22, 3
      %p66 = por %p64, %p65
      %p68 = scmp.ne.s32.totalorder %s53, %s67
      %p69 = scmp.eq.s32.totalorder %s22, 0
      %p70 = por %p68, %p69
      %s71 = ssub.s32 %s16, %s23
      %p72 = scmp.eq.s32.totalorder %s71, 0
      %s74 = sadd.s32 %s73, 1
      %s75 = scalar_select %p72, %s73, %s74
      %p78 = pneg %p72
      %p79 = scmp.eq.s32.totalorder %s16, 3
      %p80 = por %p78, %p79
      %p81 = scmp.ne.s32.totalorder %s73, %s76
      %p82 = scmp.eq.s32.totalorder %s16, 0
      %p83 = por %p81, %p82
      %p84 = scmp.ne.s32.totalorder %s73, %s76
      %p85 = scmp.eq.s32.totalorder %s21, 3
      %p86 = por %p84, %p85
      %p87 = scmp.ne.s32.totalorder %s76, %s77
      %p88 = scmp.eq.s32.totalorder %s21, 0
      %p89 = por %p87, %p88
      %p90 = scmp.ne.s32.totalorder %s76, %s77
      %p91 = scmp.eq.s32.totalorder %s22, 3
      %p92 = por %p90, %p91
      %p94 = scmp.ne.s32.totalorder %s77, %s93
      %p95 = scmp.eq.s32.totalorder %s22, 0
      %p96 = por %p94, %p95
      %s97 = ssub.s32 %s16, %s23
      %p98 = scmp.eq.s32.totalorder %s97, 0
      %s100 = sadd.s32 %s99, 1
      %s101 = scalar_select %p98, %s99, %s100
      %p104 = pneg %p98
      %p105 = scmp.eq.s32.totalorder %s16, 3
      %p106 = por %p104, %p105
      %p107 = scmp.ne.s32.totalorder %s99, %s102
      %p108 = scmp.eq.s32.totalorder %s16, 0
      %p109 = por %p107, %p108
      %p110 = scmp.ne.s32.totalorder %s99, %s102
      %p111 = scmp.eq.s32.totalorder %s21, 3
      %p112 = por %p110, %p111
      %p113 = scmp.ne.s32.totalorder %s102, %s103
      %p114 = scmp.eq.s32.totalorder %s21, 0
      %p115 = por %p113, %p114
      %p116 = scmp.ne.s32.totalorder %s102, %s103
      %p117 = scmp.eq.s32.totalorder %s22, 3
      %p118 = por %p116, %p117
      %p120 = scmp.ne.s32.totalorder %s103, %s119
      %p121 = scmp.eq.s32.totalorder %s22, 0
      %p122 = por %p120, %p121
      %p123 = scmp.le.s32.totalorder 1, %s16
      %p124 = scmp.lt.s32.totalorder %s16, 5
      %p125 = pnand %p123, %p124
      %p126 = pneg %p125
      // Predicated region
      $region9: #{tpu_custom_call.1} parent=5 // pred_check
        _
      $region10: #{tpu_custom_call.1} parent=5 // pred_check_branch
        %128 = sbr.rel (%p125) target = $region12
      $region11: #{tpu_custom_call.1} parent=5 // pred_region
        %s129 = ssub.s32 %s16, 1
        // Predicated region
        $region13: #{tpu_custom_call.1} parent=11 // pred_check
          %p130 = pneg %p63
        $region14: #{tpu_custom_call.1} parent=11 // pred_check_branch
          %132 = sbr.rel (%p130) target = $region16
        $region15: #{tpu_custom_call.1} parent=11 // pred_region
          _
        $region16: #{tpu_custom_call.1} parent=11 // pred_fallthru
          _
      $region12: #{tpu_custom_call.1} parent=5 // pred_fallthru
        _
      %p133 = scmp.lt.s32.totalorder %s16, 4
      // Predicated region
      $region17: #{tpu_custom_call.1} parent=5 // pred_check
        %p134 = pneg %p133
      $region18: #{tpu_custom_call.1} parent=5 // pred_check_branch
        %136 = sbr.rel (%p134) target = $region20
      $region19: #{tpu_custom_call.1} parent=5 // pred_region
        // Predicated region
        $region21: #{tpu_custom_call.1} parent=19 // pred_check
          %p137 = pneg %p36
        $region22: #{tpu_custom_call.1} parent=19 // pred_check_branch
          %139 = sbr.rel (%p137) target = $region24
        $region23: #{tpu_custom_call.1} parent=19 // pred_region
          %s140 = sand.u32 %s26, 1
          %s141 = scalar_lea.sflag [#allocation3], %s140
          %s142 = sand.u32 %s26, 1
          %s143 = smul.addr %s142, 128
          %s144 = scalar_lea.vmem [#allocation2], %s143
          %s145 = smul.u32 16, %s16
          %147 = vsyncadd %s141, 0
          %s148 = smul.addr %s145, 8
          %s149 = scalar_lea.hbm %s0, %s148
          %s150 = sshll.u32 %s149, 4
          %s151 = int_to_ptr.hbm [resolvable:$true] %s150
          %s152 = sshll.u32 %s144, 4
          %s153 = int_to_ptr.vmem [resolvable:$true] %s152
          %158 = dma.hbm_to_vmem [thread:$0]  %s151, 2048, %s153, %s141, 128, 128, 8
        $region24: #{tpu_custom_call.1} parent=19 // pred_fallthru
          _
      $region20: #{tpu_custom_call.1} parent=5 // pred_fallthru
        _
      %p159 = scmp.le.s32.totalorder 1, %s16
      %p160 = scmp.lt.s32.totalorder %s16, 5
      %p161 = pnand %p159, %p160
      %p162 = pneg %p161
      // Predicated region
      $region25: #{tpu_custom_call.1} parent=5 // pred_check
        _
      $region26: #{tpu_custom_call.1} parent=5 // pred_check_branch
        %164 = sbr.rel (%p161) target = $region28
      $region27: #{tpu_custom_call.1} parent=5 // pred_region
        %s165 = ssub.s32 %s16, 1
        %s166 = sand.u32 %s29, 1
        %s167 = scalar_lea.sflag [#allocation3], %s166
        %s168 = sand.u32 %s29, 1
        %s169 = smul.addr %s168, 128
        %s170 = scalar_lea.vmem [#allocation2], %s169
        // Predicated region
        $region29: #{tpu_custom_call.1} parent=27 // pred_check
          %p171 = pneg %p42
        $region30: #{tpu_custom_call.1} parent=27 // pred_check_branch
          %173 = sbr.rel (%p171) target = $region32
        $region31: #{tpu_custom_call.1} parent=27 // pred_region
          %175 = dma.done %s167, 2048
        $region32: #{tpu_custom_call.1} parent=27 // pred_fallthru
          _
        %s176 = sand.u32 %s29, 1
        %s177 = scalar_lea.sflag [#allocation3], %s176
        %s178 = sand.u32 %s29, 1
        %s179 = smul.addr %s178, 128
        %s180 = scalar_lea.vmem [#allocation2], %s179
        %p181 = pneg %p42
        %p182 = pneg %p39
        %p183 = pneg %p63
        %p184 = pneg %p60
        %p185 = pneg %p89
        %p186 = pneg %p86
        %s187 = smul.u32 16, %s21
        %p188 = scmp.lt.s32.totalorder %s187, 63
        %s189 = scalar_select %p188, %s187, 63
        %s190 = smul.addr %s189, 4
        %s191 = scalar_lea.vmem %s2, %s190
        %p192 = pneg %p115
        %p193 = pneg %p112
        %s194 = sand.u32 %s102, 1
        %s195 = scalar_lea.sflag [#allocation4], %s194
        %s196 = sand.u32 %s102, 1
        %s197 = smul.addr %s196, 8
        %s198 = scalar_lea.vmem [#allocation5], %s197
        %s199 = smul.u32 16, %s21
        %s200 = smul.u32 16, %s21
        %p201 = scmp.lt.s32.totalorder %s200, 63
        %s202 = scalar_select %p201, %s200, 63
        %s203 = smul.addr %s202, 4
        %s204 = scalar_lea.vmem %s2, %s203
        %s205 = smul.u32 16, %s21
        %v206 = vld [vmem:[%s170] sm:$0xff]
        %v207 = vld [vmem:[%s170 + $0x8] sm:$0xff]
        %v208 = vld [vmem:[%s170 + $0x10] sm:$0xff]
        %v209 = vld [vmem:[%s170 + $0x18] sm:$0xff]
        %v210 = vld [vmem:[%s170 + $0x20] sm:$0xff]
        %v211 = vld [vmem:[%s170 + $0x28] sm:$0xff]
        %v212 = vld [vmem:[%s170 + $0x30] sm:$0xff]
        %v213 = vld [vmem:[%s170 + $0x38] sm:$0xff]
        %v214 = vld [vmem:[%s170 + $0x40] sm:$0xff]
        %v215 = vld [vmem:[%s170 + $0x48] sm:$0xff]
        %v216 = vld [vmem:[%s170 + $0x50] sm:$0xff]
        %v217 = vld [vmem:[%s170 + $0x58] sm:$0xff]
        %v218 = vld [vmem:[%s170 + $0x60] sm:$0xff]
        %v219 = vld [vmem:[%s170 + $0x68] sm:$0xff]
        %v220 = vld [vmem:[%s170 + $0x70] sm:$0xff]
        %v221 = vld [vmem:[%s170 + $0x78] sm:$0xff]
        %v222 = vpack.c.bf16 %v207, %v206
        %v223 = vpack.c.bf16 %v209, %v208
        %v224 = vpack.c.bf16 %v211, %v210
        %v225 = vpack.c.bf16 %v213, %v212
        %v226 = vpack.c.bf16 %v215, %v214
        %v227 = vpack.c.bf16 %v217, %v216
        %v228 = vpack.c.bf16 %v219, %v218
        %v229 = vpack.c.bf16 %v221, %v220
        %v230 = vld [vmem:[%s1] sm:$0xf]
        %v231 = vld [vmem:[%s1 + $0x4] sm:$0xf]
        %v232 = vld [vmem:[%s1 + $0x8] sm:$0xf]
        %v233 = vld [vmem:[%s1 + $0xc] sm:$0xf]
        %v234 = vld [vmem:[%s1 + $0x10] sm:$0xf]
        %v235 = vld [vmem:[%s1 + $0x14] sm:$0xf]
        %v236 = vld [vmem:[%s1 + $0x18] sm:$0xf]
        %v237 = vld [vmem:[%s1 + $0x1c] sm:$0xf]
        %v238 = vld [vmem:[%s1 + $0x20] sm:$0xf]
        %v239 = vld [vmem:[%s1 + $0x24] sm:$0xf]
        %v240 = vld [vmem:[%s1 + $0x28] sm:$0xf]
        %v241 = vld [vmem:[%s1 + $0x2c] sm:$0xf]
        %v242 = vld [vmem:[%s1 + $0x30] sm:$0xf]
        %v243 = vld [vmem:[%s1 + $0x34] sm:$0xf]
        %v244 = vld [vmem:[%s1 + $0x38] sm:$0xf]
        %v245 = vld [vmem:[%s1 + $0x3c] sm:$0xf]
        %v262 = vunpack.c.l.b16 %v230
        %v263 = vunpack.c.l.b16 %v231
        %v264 = vunpack.c.l.b16 %v232
        %v265 = vunpack.c.l.b16 %v233
        %v266 = vunpack.c.l.b16 %v234
        %v267 = vunpack.c.l.b16 %v235
        %v268 = vunpack.c.l.b16 %v236
        %v269 = vunpack.c.l.b16 %v237
        %v270 = vunpack.c.l.b16 %v238
        %v271 = vunpack.c.l.b16 %v239
        %v272 = vunpack.c.l.b16 %v240
        %v273 = vunpack.c.l.b16 %v241
        %v274 = vunpack.c.l.b16 %v242
        %v275 = vunpack.c.l.b16 %v243
        %v276 = vunpack.c.l.b16 %v244
        %v277 = vunpack.c.l.b16 %v245
        %v278 = vpack.c.b16 %v263, %v262
        %v279 = vpack.c.b16 %v265, %v264
        %v280 = vpack.c.b16 %v267, %v266
        %v281 = vpack.c.b16 %v269, %v268
        %v282 = vpack.c.b16 %v271, %v270
        %v283 = vpack.c.b16 %v273, %v272
        %v284 = vpack.c.b16 %v275, %v274
        %v285 = vpack.c.b16 %v277, %v276
        %294 = vmatpush.bf16.msra.mxu0 %v285
        %295 = vmatpush.bf16.msra.mxu0 %v284
        %296 = vmatpush.bf16.msra.mxu0 %v283
        %297 = vmatpush.bf16.msra.mxu0 %v282
        %298 = vmatpush.bf16.msra.mxu0 %v281
        %299 = vmatpush.bf16.msra.mxu0 %v280
        %300 = vmatpush.bf16.msra.mxu0 %v279
        %301 = vmatpush.bf16.msra.mxu0 %v278
        %302 = vmatmul.bf16.gmra.mxu0 %v222
        %v303 = vpop.f32.mrf.mxu0
        %v304 = vadd.f32 0.0, %v303
        %v305 = vpop.f32.mrf.mxu0
        %v306 = vadd.f32 0.0, %v305
        %307 = vmatmul.bf16.gmra.mxu0 %v223
        %v308 = vpop.f32.mrf.mxu0
        %v309 = vadd.f32 0.0, %v308
        %v310 = vpop.f32.mrf.mxu0
        %v311 = vadd.f32 0.0, %v310
        %312 = vmatmul.bf16.gmra.mxu0 %v224
        %v313 = vpop.f32.mrf.mxu0
        %v314 = vadd.f32 0.0, %v313
        %v315 = vpop.f32.mrf.mxu0
        %v316 = vadd.f32 0.0, %v315
        %317 = vmatmul.bf16.gmra.mxu0 %v225
        %v318 = vpop.f32.mrf.mxu0
        %v319 = vadd.f32 0.0, %v318
        %v320 = vpop.f32.mrf.mxu0
        %v321 = vadd.f32 0.0, %v320
        %322 = vmatmul.bf16.gmra.mxu0 %v226
        %v323 = vpop.f32.mrf.mxu0
        %v324 = vadd.f32 0.0, %v323
        %v325 = vpop.f32.mrf.mxu0
        %v326 = vadd.f32 0.0, %v325
        %327 = vmatmul.bf16.gmra.mxu0 %v227
        %v328 = vpop.f32.mrf.mxu0
        %v329 = vadd.f32 0.0, %v328
        %v330 = vpop.f32.mrf.mxu0
        %v331 = vadd.f32 0.0, %v330
        %332 = vmatmul.bf16.gmra.mxu0 %v228
        %v333 = vpop.f32.mrf.mxu0
        %v334 = vadd.f32 0.0, %v333
        %v335 = vpop.f32.mrf.mxu0
        %v336 = vadd.f32 0.0, %v335
        %337 = vmatmul.bf16.gmra.mxu0 %v229
        %v338 = vpop.f32.mrf.mxu0
        %v339 = vadd.f32 0.0, %v338
        %v340 = vpop.f32.mrf.mxu0
        %v341 = vadd.f32 0.0, %v340
        %342 = vdwg.mxu0
        %v343 = vpack.c.bf16 %v304, %v304
        %v344 = vpack.c.bf16 %v306, %v306
        %v345 = vpack.c.bf16 %v309, %v309
        %v346 = vpack.c.bf16 %v311, %v311
        %v347 = vpack.c.bf16 %v314, %v314
        %v348 = vpack.c.bf16 %v316, %v316
        %v349 = vpack.c.bf16 %v319, %v319
        %v350 = vpack.c.bf16 %v321, %v321
        %v351 = vpack.c.bf16 %v324, %v324
        %v352 = vpack.c.bf16 %v326, %v326
        %v353 = vpack.c.bf16 %v329, %v329
        %v354 = vpack.c.bf16 %v331, %v331
        %v355 = vpack.c.bf16 %v334, %v334
        %v356 = vpack.c.bf16 %v336, %v336
        %v357 = vpack.c.bf16 %v339, %v339
        %v358 = vpack.c.bf16 %v341, %v341
        %vm359 = vcmask 257024
        %360 = vst.msk [vmem:[%s204] sm:$0xf] %vm359, %v343
        %361 = vst.msk [vmem:[%s204 + $0x4] sm:$0xf] %vm359, %v344
        %362 = vst.msk [vmem:[%s204 + $0x8] sm:$0xf] %vm359, %v345
        %363 = vst.msk [vmem:[%s204 + $0xc] sm:$0xf] %vm359, %v346
        %364 = vst.msk [vmem:[%s204 + $0x10] sm:$0xf] %vm359, %v347
        %365 = vst.msk [vmem:[%s204 + $0x14] sm:$0xf] %vm359, %v348
        %366 = vst.msk [vmem:[%s204 + $0x18] sm:$0xf] %vm359, %v349
        %367 = vst.msk [vmem:[%s204 + $0x1c] sm:$0xf] %vm359, %v350
        %368 = vst.msk [vmem:[%s204 + $0x20] sm:$0xf] %vm359, %v351
        %369 = vst.msk [vmem:[%s204 + $0x24] sm:$0xf] %vm359, %v352
        %370 = vst.msk [vmem:[%s204 + $0x28] sm:$0xf] %vm359, %v353
        %371 = vst.msk [vmem:[%s204 + $0x2c] sm:$0xf] %vm359, %v354
        %372 = vst.msk [vmem:[%s204 + $0x30] sm:$0xf] %vm359, %v355
        %373 = vst.msk [vmem:[%s204 + $0x34] sm:$0xf] %vm359, %v356
        %374 = vst.msk [vmem:[%s204 + $0x38] sm:$0xf] %vm359, %v357
        %375 = vst.msk [vmem:[%s204 + $0x3c] sm:$0xf] %vm359, %v358
        %v376 = vunpack.c.l.bf16 %v343
        %v377 = vunpack.c.l.bf16 %v344
        %v378 = vunpack.c.l.bf16 %v345
        %v379 = vunpack.c.l.bf16 %v346
        %v380 = vunpack.c.l.bf16 %v347
        %v381 = vunpack.c.l.bf16 %v348
        %v382 = vunpack.c.l.bf16 %v349
        %v383 = vunpack.c.l.bf16 %v350
        %v384 = vunpack.c.l.bf16 %v351
        %v385 = vunpack.c.l.bf16 %v352
        %v386 = vunpack.c.l.bf16 %v353
        %v387 = vunpack.c.l.bf16 %v354
        %v388 = vunpack.c.l.bf16 %v355
        %v389 = vunpack.c.l.bf16 %v356
        %v390 = vunpack.c.l.bf16 %v357
        %v391 = vunpack.c.l.bf16 %v358
        %vm392 = vcmask 261120
        %v393 = vsel %vm392, %v376, 0.0
        %v394 = vsel %vm392, %v377, 0.0
        %v395 = vadd.f32 %v393, %v394
        %v396 = vsel %vm392, %v378, 0.0
        %v397 = vadd.f32 %v395, %v396
        %v398 = vsel %vm392, %v379, 0.0
        %v399 = vadd.f32 %v397, %v398
        %v400 = vsel %vm392, %v380, 0.0
        %v401 = vadd.f32 %v399, %v400
        %v402 = vsel %vm392, %v381, 0.0
        %v403 = vadd.f32 %v401, %v402
        %v404 = vsel %vm392, %v382, 0.0
        %v405 = vadd.f32 %v403, %v404
        %v406 = vsel %vm392, %v383, 0.0
        %v407 = vadd.f32 %v405, %v406
        %v408 = vsel %vm392, %v384, 0.0
        %v409 = vadd.f32 %v407, %v408
        %v410 = vsel %vm392, %v385, 0.0
        %v411 = vadd.f32 %v409, %v410
        %v412 = vsel %vm392, %v386, 0.0
        %v413 = vadd.f32 %v411, %v412
        %v414 = vsel %vm392, %v387, 0.0
        %v415 = vadd.f32 %v413, %v414
        %v416 = vsel %vm392, %v388, 0.0
        %v417 = vadd.f32 %v415, %v416
        %v418 = vsel %vm392, %v389, 0.0
        %v419 = vadd.f32 %v417, %v418
        %v420 = vsel %vm392, %v390, 0.0
        %v421 = vadd.f32 %v419, %v420
        %v422 = vsel %vm392, %v391, 0.0
        %v423 = vadd.f32 %v421, %v422
        %v424 = vrot.slane %v423, 4
        %v425 = vadd.f32 %v423, %v424
        %v426 = vrot.slane %v425, 2
        %v427 = vadd.f32 %v425, %v426
        %v428 = vrot.slane %v427, 1
        %v429 = vadd.f32 %v427, %v428
        %v430 = vmul.f32 %v376, %v376
        %v431 = vmul.f32 %v377, %v377
        %v432 = vmul.f32 %v378, %v378
        %v433 = vmul.f32 %v379, %v379
        %v434 = vmul.f32 %v380, %v380
        %v435 = vmul.f32 %v381, %v381
        %v436 = vmul.f32 %v382, %v382
        %v437 = vmul.f32 %v383, %v383
        %v438 = vmul.f32 %v384, %v384
        %v439 = vmul.f32 %v385, %v385
        %v440 = vmul.f32 %v386, %v386
        %v441 = vmul.f32 %v387, %v387
        %v442 = vmul.f32 %v388, %v388
        %v443 = vmul.f32 %v389, %v389
        %v444 = vmul.f32 %v390, %v390
        %v445 = vmul.f32 %v391, %v391
        %v446 = vsel %vm392, %v430, 0.0
        %v447 = vsel %vm392, %v431, 0.0
        %v448 = vadd.f32 %v446, %v447
        %v449 = vsel %vm392, %v432, 0.0
        %v450 = vadd.f32 %v448, %v449
        %v451 = vsel %vm392, %v433, 0.0
        %v452 = vadd.f32 %v450, %v451
        %v453 = vsel %vm392, %v434, 0.0
        %v454 = vadd.f32 %v452, %v453
        %v455 = vsel %vm392, %v435, 0.0
        %v456 = vadd.f32 %v454, %v455
        %v457 = vsel %vm392, %v436, 0.0
        %v458 = vadd.f32 %v456, %v457
        %v459 = vsel %vm392, %v437, 0.0
        %v460 = vadd.f32 %v458, %v459
        %v461 = vsel %vm392, %v438, 0.0
        %v462 = vadd.f32 %v460, %v461
        %v463 = vsel %vm392, %v439, 0.0
        %v464 = vadd.f32 %v462, %v463
        %v465 = vsel %vm392, %v440, 0.0
        %v466 = vadd.f32 %v464, %v465
        %v467 = vsel %vm392, %v441, 0.0
        %v468 = vadd.f32 %v466, %v467
        %v469 = vsel %vm392, %v442, 0.0
        %v470 = vadd.f32 %v468, %v469
        %v471 = vsel %vm392, %v443, 0.0
        %v472 = vadd.f32 %v470, %v471
        %v473 = vsel %vm392, %v444, 0.0
        %v474 = vadd.f32 %v472, %v473
        %v475 = vsel %vm392, %v445, 0.0
        %v476 = vadd.f32 %v474, %v475
        %v477 = vrot.slane %v476, 4
        %v478 = vadd.f32 %v476, %v477
        %v479 = vrot.slane %v478, 2
        %v480 = vadd.f32 %v478, %v479
        %v481 = vrot.slane %v480, 1
        %v482 = vadd.f32 %v480, %v481
        %vm483 = vcmask 1040384
        %v484 = vsel %vm483, %v429, %v482
        %vm485 = vcmask 1041408
        %v486 = vsel %vm485, %v484, 0.0
        %487 = vst.msk [vmem:[%s198] sm:$0xff] %vm392, %v486
        %s488 = smul.u32 16, %s21
        %p489 = scmp.lt.s32.totalorder %s488, 63
        %s490 = scalar_select %p489, %s488, 63
        %s491 = smul.addr %s490, 4
        %s492 = scalar_lea.vmem %s2, %s491
        %s493 = sand.u32 %s102, 1
        %s494 = scalar_lea.sflag [#allocation4], %s493
        %s495 = sand.u32 %s102, 1
        %s496 = smul.addr %s495, 8
        %s497 = scalar_lea.vmem [#allocation5], %s496
        // Predicated region
        $region33: #{tpu_custom_call.1} parent=27 // pred_check
          %p498 = pneg %p86
        $region34: #{tpu_custom_call.1} parent=27 // pred_check_branch
          %500 = sbr.rel (%p498) target = $region36
        $region35: #{tpu_custom_call.1} parent=27 // pred_region
          %s501 = smul.u32 16, %s21
        $region36: #{tpu_custom_call.1} parent=27 // pred_fallthru
          _
        // Predicated region
        $region37: #{tpu_custom_call.1} parent=27 // pred_check
          %p502 = pneg %p112
        $region38: #{tpu_custom_call.1} parent=27 // pred_check_branch
          %504 = sbr.rel (%p502) target = $region40
        $region39: #{tpu_custom_call.1} parent=27 // pred_region
          %506 = vsyncadd %s494, 0
          %s507 = smul.addr %s21, 8
          %s508 = scalar_lea.hbm %s3, %s507
          %s510 = sshll.u32 %s497, 4
          %s511 = int_to_ptr.vmem [resolvable:$true] %s510
          %s512 = sshll.u32 %s508, 4
          %s513 = int_to_ptr.hbm [resolvable:$true] %s512
          %515 = dma.vmem_to_hbm [thread:$0]  %s511, 128, %s513, %s494
        $region40: #{tpu_custom_call.1} parent=27 // pred_fallthru
          _
      $region28: #{tpu_custom_call.1} parent=5 // pred_fallthru
        _
      %p516 = scmp.le.s32.totalorder 2, %s16
      // Predicated region
      $region41: #{tpu_custom_call.1} parent=5 // pred_check
        %p517 = pneg %p516
      $region42: #{tpu_custom_call.1} parent=5 // pred_check_branch
        %519 = sbr.rel (%p517) target = $region44
      $region43: #{tpu_custom_call.1} parent=5 // pred_region
        %s520 = ssub.s32 %s16, 2
        // Predicated region
        $region45: #{tpu_custom_call.1} parent=43 // pred_check
          %p521 = pneg %p92
        $region46: #{tpu_custom_call.1} parent=43 // pred_check_branch
          %523 = sbr.rel (%p521) target = $region48
        $region47: #{tpu_custom_call.1} parent=43 // pred_region
          %s524 = smul.u32 16, %s22
          %p525 = scmp.lt.s32.totalorder %s524, 63
          %s526 = scalar_select %p525, %s524, 63
          %s527 = smul.addr %s526, 4
          %s528 = scalar_lea.vmem %s2, %s527
        $region48: #{tpu_custom_call.1} parent=43 // pred_fallthru
          _
        // Predicated region
        $region49: #{tpu_custom_call.1} parent=43 // pred_check
          %p529 = pneg %p118
        $region50: #{tpu_custom_call.1} parent=43 // pred_check_branch
          %531 = sbr.rel (%p529) target = $region52
        $region51: #{tpu_custom_call.1} parent=43 // pred_region
          %s532 = sand.u32 %s103, 1
          %s533 = scalar_lea.sflag [#allocation4], %s532
          %s534 = sand.u32 %s103, 1
          %s535 = smul.addr %s534, 8
          %s536 = scalar_lea.vmem [#allocation5], %s535
          %538 = dma.done %s533, 128
        $region52: #{tpu_custom_call.1} parent=43 // pred_fallthru
          _
      $region44: #{tpu_custom_call.1} parent=5 // pred_fallthru
        _
    $region6: #{tpu_custom_call.1} parent=1 // loop_footer
      %s20 = sadd.s32 1, %s16
    $region7: #{tpu_custom_call.1} parent=1 // loop_footer_branch
      %15 = sbr.rel target = $region3
    $region8: #{tpu_custom_call.1} parent=1 // loop_exit
      _
    %539 = vsyncpa [#allocation3], 1
    %s540 = scalar_lea.sflag [#allocation3], 1
    %541 = vsyncpa %s540, 1
    %542 = vsyncpa [#allocation4], 1
    %s543 = scalar_lea.sflag [#allocation4], 1
    %544 = vsyncpa %s543, 1

</llo_original>
